<compile_context>
chip_gen: v6e
topology: v6e:2x2x1
jax: 0.10.0
libtpu: 0.0.40
codegen_flags: <defaults>
</compile_context>

<pallas_src>
import functools
import math

import jax
import jax.numpy as jnp
from jax.experimental import pallas as pl
from jax.experimental.pallas import tpu as pltpu


def _moe_kernel(x_ref, w1t_ref, b1_ref, w2t_ref, b2_ref, o_ref, *,
                negative_slope, inv_sqrt_ne):
    # Row tile of the flattened input: (TM, hidden), bf16.
    x = x_ref[...]

    # Linear1: (TM, hidden) @ (hidden, 4E)  -> MXU, f32 accumulation.
    h = jnp.dot(x, w1t_ref[...], preferred_element_type=jnp.float32)
    h = h + b1_ref[...]

    # LeakyReLU(negative_slope)   (Dropout == identity in eval mode)
    h = jnp.where(h > 0, h, negative_slope * h)

    # Linear2: (TM, 4E) @ (4E, E)  -> MXU, f32.
    logits = jnp.dot(h, w2t_ref[...], preferred_element_type=jnp.float32) + b2_ref[...]

    # Scale by 1/sqrt(nexpert), numerically-stable softmax over the expert axis.
    logits = logits * inv_sqrt_ne
    m = jnp.max(logits, axis=-1, keepdims=True)
    e = jnp.exp(logits - m)
    denom = jnp.sum(e, axis=-1, keepdims=True)
    o_ref[...] = (e * pl.reciprocal(denom, approx=True)).astype(o_ref.dtype)


def moe_forward(x, w1, b1, w2, b2, *, nexpert, rate=0.1, tm=512):
    """x: [..., hidden]. w1: (4E, hidden), b1: (4E,), w2: (E, 4E), b2: (E,)."""
    hidden = x.shape[-1]
    lead = x.shape[:-1]
    n4 = w1.shape[0]
    ne = w2.shape[0]
    assert ne == nexpert and n4 == 4 * nexpert
    assert w1.shape[1] == hidden and w2.shape[1] == n4

    # bf16 inputs halve HBM read traffic for the dominant stream (x).
    xf = x.reshape(-1, hidden).astype(jnp.bfloat16)
    n = xf.shape[0]

    # Row tile: multiple of 16 (bf16 sublane tile is (16,128)); clamp so tiny
    # inputs don't get over-padded, then pad N up to a multiple of tm.
    tm = max(16, min(int(tm), pl.cdiv(n, 16) * 16))
    n_padded = pl.cdiv(n, tm) * tm
    if n_padded != n:
        xf = jnp.pad(xf, ((0, n_padded - n), (0, 0)))

    w1t = jnp.asarray(w1, jnp.bfloat16).T              # (hidden, 4E), bf16
    w2t = jnp.asarray(w2, jnp.float32).T               # (4E, E), tiny -> f32
    b1r = jnp.asarray(b1, jnp.float32).reshape(1, n4)
    b2r = jnp.asarray(b2, jnp.float32).reshape(1, ne)

    kernel = functools.partial(
        _moe_kernel,
        negative_slope=float(rate),                    # nn.LeakyReLU(rate)
        inv_sqrt_ne=float(1.0 / math.sqrt(nexpert)),
    )

    out = pl.pallas_call(
        kernel,
        out_shape=jax.ShapeDtypeStruct((n_padded, ne), jnp.float32),
        grid_spec=pltpu.PrefetchScalarGridSpec(
            num_scalar_prefetch=0,
            grid=(n_padded // tm,),
            in_specs=[
                pl.BlockSpec((tm, hidden), lambda i: (i, 0)),   # x row tile (bf16)
                pl.BlockSpec((hidden, n4), lambda i: (0, 0)),   # W1^T (VMEM-resident)
                pl.BlockSpec((1, n4), lambda i: (0, 0)),        # b1
                pl.BlockSpec((n4, ne), lambda i: (0, 0)),       # W2^T (VMEM-resident)
                pl.BlockSpec((1, ne), lambda i: (0, 0)),        # b2
            ],
            out_specs=pl.BlockSpec((tm, ne), lambda i: (i, 0)),
        ),
        compiler_params=pltpu.CompilerParams(
            dimension_semantics=("parallel",),          # v7x: 2 TCs shard this axis
        ),
    )(xf, w1t, b1r, w2t, b2r)

    out = out[:n]                                       # drop padded rows
    return out.reshape(*lead, ne)


def _ref_forward(x, w1, b1, w2, b2, *, nexpert, rate=0.1):
    # Mirror the kernel's input precision: x and W1 are consumed as bf16.
    xb = x.astype(jnp.bfloat16).astype(jnp.float32)
    w1b = jnp.asarray(w1).astype(jnp.bfloat16).astype(jnp.float32)
    h = xb @ w1b.T + b1
    h = jnp.where(h > 0, h, rate * h)
    logits = h @ w2.T + b2
    return jax.nn.softmax(logits / math.sqrt(nexpert), axis=-1)


if __name__ == "__main__":
    # Small shapes consistent with the module: batch=2, seq=8, hidden=96, nexpert=4
    hidden, nexpert, rate = 96, 4, 0.1
    key = jax.random.PRNGKey(0)
    kx, kw1, kb1, kw2, kb2 = jax.random.split(key, 5)

    x = jax.random.normal(kx, (2, 8, hidden), dtype=jnp.float32)

    # Deterministic PyTorch-style Linear init: U(-1/sqrt(fan_in), 1/sqrt(fan_in))
    bound1 = 1.0 / math.sqrt(hidden)
    w1 = jax.random.uniform(kw1, (nexpert * 4, hidden), jnp.float32, -bound1, bound1)
    b1 = jax.random.uniform(kb1, (nexpert * 4,), jnp.float32, -bound1, bound1)
    bound2 = 1.0 / math.sqrt(nexpert * 4)
    w2 = jax.random.uniform(kw2, (nexpert, nexpert * 4), jnp.float32, -bound2, bound2)
    b2 = jax.random.uniform(kb2, (nexpert,), jnp.float32, -bound2, bound2)

    out = moe_forward(x, w1, b1, w2, b2, nexpert=nexpert, rate=rate)
    out = jax.block_until_ready(out)

    ref = _ref_forward(x, w1, b1, w2, b2, nexpert=nexpert, rate=rate)
    assert out.shape == (2, 8, nexpert)
    # Tolerance accounts for bf16 inputs + EUP approx reciprocal in the softmax.
    assert jnp.allclose(out, ref, atol=2e-3, rtol=2e-3), "mismatch vs JAX reference"

    print("KERNEL_OK")
</pallas_src>

<mosaic_0001>
module attributes {stable_mosaic.version = 11 : i64} {
  func.func @_moe_kernel(%arg0: i32, %arg1: memref<16x96xbf16, #tpu.memory_space<vmem>>, %arg2: memref<96x16xbf16, #tpu.memory_space<vmem>>, %arg3: memref<1x16xf32, #tpu.memory_space<vmem>>, %arg4: memref<16x4xf32, #tpu.memory_space<vmem>>, %arg5: memref<1x4xf32, #tpu.memory_space<vmem>>, %arg6: memref<16x4xf32, #tpu.memory_space<vmem>>) attributes {dimension_semantics = [#tpu.dimension_semantics<parallel>], iteration_bounds = array<i64: 1>, scalar_prefetch = 0 : i64, scratch_operands = 0 : i64, tpu.core_type = #tpu.core_type<tc>, window_params = [{transform_indices = @transform_0, window_bounds = array<i64: 16, 96>}, {pipeline_mode = #tpu.pipeline_mode<synchronous>, transform_indices = @transform_1, window_bounds = array<i64: 96, 16>}, {pipeline_mode = #tpu.pipeline_mode<synchronous>, transform_indices = @transform_2, window_bounds = array<i64: 1, 16>}, {pipeline_mode = #tpu.pipeline_mode<synchronous>, transform_indices = @transform_3, window_bounds = array<i64: 16, 4>}, {pipeline_mode = #tpu.pipeline_mode<synchronous>, transform_indices = @transform_4, window_bounds = array<i64: 1, 4>}, {transform_indices = @transform_5, window_bounds = array<i64: 16, 4>}]} {
    %c0 = arith.constant 0 : index
    %c0_0 = arith.constant 0 : index
    %0 = vector.load %arg1[%c0, %c0_0] : memref<16x96xbf16, #tpu.memory_space<vmem>>, vector<16x96xbf16>
    %c0_1 = arith.constant 0 : index
    %c0_2 = arith.constant 0 : index
    %1 = vector.load %arg2[%c0_1, %c0_2] : memref<96x16xbf16, #tpu.memory_space<vmem>>, vector<96x16xbf16>
    %cst = arith.constant dense<0.000000e+00> : vector<16x16xf32>
    %2 = tpu.matmul %0, %1, %cst {dimension_numbers = #tpu.dot_dimension_numbers<[1], [0], [0], [1], [0, 0, 1, 1], [], []>} : vector<16x96xbf16>, vector<96x16xbf16>, vector<16x16xf32> -> vector<16x16xf32>
    %c0_3 = arith.constant 0 : index
    %c0_4 = arith.constant 0 : index
    %3 = vector.load %arg3[%c0_3, %c0_4] : memref<1x16xf32, #tpu.memory_space<vmem>>, vector<1x16xf32>
    %4 = vector.broadcast %3 : vector<1x16xf32> to vector<16x16xf32>
    %5 = arith.addf %2, %4 : vector<16x16xf32>
    %cst_5 = arith.constant 0.000000e+00 : f32
    %6 = vector.broadcast %cst_5 : f32 to vector<16x16xf32>
    %7 = arith.cmpf ogt, %5, %6 : vector<16x16xf32>
    %cst_6 = arith.constant 1.000000e-01 : f32
    %8 = vector.broadcast %cst_6 : f32 to vector<16x16xf32>
    %9 = arith.mulf %8, %5 : vector<16x16xf32>
    %10 = arith.select %7, %5, %9 : vector<16x16xi1>, vector<16x16xf32>
    %c0_7 = arith.constant 0 : index
    %c0_8 = arith.constant 0 : index
    %11 = vector.load %arg4[%c0_7, %c0_8] : memref<16x4xf32, #tpu.memory_space<vmem>>, vector<16x4xf32>
    %cst_9 = arith.constant dense<0.000000e+00> : vector<16x4xf32>
    %12 = tpu.matmul %10, %11, %cst_9 {dimension_numbers = #tpu.dot_dimension_numbers<[1], [0], [0], [1], [0, 0, 1, 1], [], []>} : vector<16x16xf32>, vector<16x4xf32>, vector<16x4xf32> -> vector<16x4xf32>
    %c0_10 = arith.constant 0 : index
    %c0_11 = arith.constant 0 : index
    %13 = vector.load %arg5[%c0_10, %c0_11] : memref<1x4xf32, #tpu.memory_space<vmem>>, vector<1x4xf32>
    %14 = vector.broadcast %13 : vector<1x4xf32> to vector<16x4xf32>
    %15 = arith.addf %12, %14 : vector<16x4xf32>
    %cst_12 = arith.constant 5.000000e-01 : f32
    %16 = vector.broadcast %cst_12 : f32 to vector<16x4xf32>
    %17 = arith.mulf %15, %16 : vector<16x4xf32>
    %cst_13 = arith.constant dense<0xFF800000> : vector<16xf32>
    %18 = vector.multi_reduction <maximumf>, %17, %cst_13 [1] : vector<16x4xf32> to vector<16xf32>
    %19 = vector.shape_cast %18 : vector<16xf32> to vector<16x1xf32>
    %20 = vector.broadcast %19 : vector<16x1xf32> to vector<16x4xf32>
    %21 = arith.subf %17, %20 : vector<16x4xf32>
    %22 = math.exp %21 : vector<16x4xf32>
    %cst_14 = arith.constant dense<0.000000e+00> : vector<16xf32>
    %23 = vector.multi_reduction <add>, %22, %cst_14 [1] : vector<16x4xf32> to vector<16xf32>
    %24 = vector.shape_cast %23 : vector<16xf32> to vector<16x1xf32>
    %25 = tpu.reciprocal %24 {approx = true} : vector<16x1xf32> -> vector<16x1xf32>
    %26 = vector.broadcast %25 : vector<16x1xf32> to vector<16x4xf32>
    %27 = arith.mulf %22, %26 : vector<16x4xf32>
    %c0_15 = arith.constant 0 : index
    %c0_16 = arith.constant 0 : index
    %28 = vector.load %arg6[%c0_15, %c0_16] : memref<16x4xf32, #tpu.memory_space<vmem>>, vector<16x4xf32>
    tpu.vector_store %arg6[%c0_15, %c0_16], %27 {strides = array<i32>} : memref<16x4xf32, #tpu.memory_space<vmem>>, vector<16x4xf32>,
    return
  }
  func.func @transform_0(%arg0: i32) -> (i32, i32) {
    %c0_i32 = arith.constant 0 : i32
    %c0_i32_0 = arith.constant 0 : i32
    return %arg0, %c0_i32 : i32, i32
  }
  func.func @transform_1(%arg0: i32) -> (i32, i32) {
    %c0_i32 = arith.constant 0 : i32
    %c0_i32_0 = arith.constant 0 : i32
    %c0_i32_1 = arith.constant 0 : i32
    return %c0_i32, %c0_i32_0 : i32, i32
  }
  func.func @transform_2(%arg0: i32) -> (i32, i32) {
    %c0_i32 = arith.constant 0 : i32
    %c0_i32_0 = arith.constant 0 : i32
    %c0_i32_1 = arith.constant 0 : i32
    return %c0_i32, %c0_i32_0 : i32, i32
  }
  func.func @transform_3(%arg0: i32) -> (i32, i32) {
    %c0_i32 = arith.constant 0 : i32
    %c0_i32_0 = arith.constant 0 : i32
    %c0_i32_1 = arith.constant 0 : i32
    return %c0_i32, %c0_i32_0 : i32, i32
  }
  func.func @transform_4(%arg0: i32) -> (i32, i32) {
    %c0_i32 = arith.constant 0 : i32
    %c0_i32_0 = arith.constant 0 : i32
    %c0_i32_1 = arith.constant 0 : i32
    return %c0_i32, %c0_i32_0 : i32, i32
  }
  func.func @transform_5(%arg0: i32) -> (i32, i32) {
    %c0_i32 = arith.constant 0 : i32
    %c0_i32_0 = arith.constant 0 : i32
    return %arg0, %c0_i32 : i32, i32
  }
}

</mosaic_0001>

<llo_original>
// kernel: tpu_custom_call.1
$region0: #{tpu_custom_call.1}
  #allocation0 [shape = 'u32[]', space=smem, size = 0x4, offset = 0x4, fixed_abs, tag = 'smem constant byte address 0x4 - core index']
  #allocation1 [shape = 'u32[144,128]{1,0:T(1,128)}', space=vmem, size = 0x12000, scoped, tag = 'internal scratch']
  %s0 = inlined_call_operand.vmem [shape: bf16[16,96], index: 0, kind: input, shape index: {}]
  %s1 = inlined_call_operand.vmem [shape: bf16[96,16], index: 1, kind: input, shape index: {}]
  %s2 = inlined_call_operand.vmem [shape: f32[1,16], index: 2, kind: input, shape index: {}]
  %s3 = inlined_call_operand.vmem [shape: f32[16,4], index: 3, kind: input, shape index: {}]
  %s4 = inlined_call_operand.vmem [shape: f32[1,4], index: 4, kind: input, shape index: {}]
  %s5 = inlined_call_operand.vmem [shape: f32[16,4], index: 5, kind: output, shape index: {}]
  %s6 = sld [smem:[#allocation0]]
  $region30: #{tpu_custom_call.1} parent=0
    _
  %s8 = ssub.s32 1, %s6
  %s9 = scalar_select 0, %s8, %s6
  // Predicated region
  $region2: #{tpu_custom_call.1} parent=0 // pred_check
    _
  $region3: #{tpu_custom_call.1} parent=0 // pred_check_branch
    %11 = sbr.rel (0) target = $region5
  $region4: #{tpu_custom_call.1} parent=0 // pred_region
    _
  $region5: #{tpu_custom_call.1} parent=0 // pred_fallthru
    _
  // Predicated region
  $region6: #{tpu_custom_call.1} parent=0 // pred_check
    _
  $region7: #{tpu_custom_call.1} parent=0 // pred_check_branch
    %13 = sbr.rel (0) target = $region9
  $region8: #{tpu_custom_call.1} parent=0 // pred_region
    _
  $region9: #{tpu_custom_call.1} parent=0 // pred_fallthru
    _
  // Predicated region
  $region10: #{tpu_custom_call.1} parent=0 // pred_check
    _
  $region11: #{tpu_custom_call.1} parent=0 // pred_check_branch
    %15 = sbr.rel (0) target = $region13
  $region12: #{tpu_custom_call.1} parent=0 // pred_region
    _
  $region13: #{tpu_custom_call.1} parent=0 // pred_fallthru
    _
  // Predicated region
  $region14: #{tpu_custom_call.1} parent=0 // pred_check
    _
  $region15: #{tpu_custom_call.1} parent=0 // pred_check_branch
    %17 = sbr.rel (0) target = $region17
  $region16: #{tpu_custom_call.1} parent=0 // pred_region
    _
  $region17: #{tpu_custom_call.1} parent=0 // pred_fallthru
    _
  // Predicated region
  $region18: #{tpu_custom_call.1} parent=0 // pred_check
    _
  $region19: #{tpu_custom_call.1} parent=0 // pred_check_branch
    %19 = sbr.rel (0) target = $region21
  $region20: #{tpu_custom_call.1} parent=0 // pred_region
    _
  $region21: #{tpu_custom_call.1} parent=0 // pred_fallthru
    _
  %v21 = vld [vmem:[%s0] sm:$0xf]
  %v22 = vld [vmem:[%s0 + $0x4] sm:$0xf]
  %v23 = vld [vmem:[%s1] sm:$0xf]
  %v24 = vld [vmem:[%s1 + $0x4] sm:$0xf]
  %v25 = vld [vmem:[%s1 + $0x8] sm:$0xf]
  %v26 = vld [vmem:[%s1 + $0xc] sm:$0xf]
  %v27 = vld [vmem:[%s1 + $0x10] sm:$0xf]
  %v28 = vld [vmem:[%s1 + $0x14] sm:$0xf]
  %v29 = vld [vmem:[%s1 + $0x18] sm:$0xf]
  %v30 = vld [vmem:[%s1 + $0x1c] sm:$0xf]
  %v31 = vld [vmem:[%s1 + $0x20] sm:$0xf]
  %v32 = vld [vmem:[%s1 + $0x24] sm:$0xf]
  %v33 = vld [vmem:[%s1 + $0x28] sm:$0xf]
  %v34 = vld [vmem:[%s1 + $0x2c] sm:$0xf]
  %v35 = vld [vmem:[%s2] sm:$0x1]
  %v37 = vlaneseq
  %v38 = vshrl.u32 %v37, 7
  %v39 = vsub.s32 0, %v38
  %v40 = vrot.slane %v35, %v39
  %v44 = vunpack.c.l.b16 %v21
  %v45 = vunpack.c.l.b16 %v22
  %v46 = vpack.c.b16 %v45, %v44
  %v59 = vunpack.c.l.b16 %v23
  %v60 = vunpack.c.l.b16 %v24
  %v61 = vunpack.c.l.b16 %v25
  %v62 = vunpack.c.l.b16 %v26
  %v63 = vunpack.c.l.b16 %v27
  %v64 = vunpack.c.l.b16 %v28
  %v65 = vunpack.c.l.b16 %v29
  %v66 = vunpack.c.l.b16 %v30
  %v67 = vunpack.c.l.b16 %v31
  %v68 = vunpack.c.l.b16 %v32
  %v69 = vunpack.c.l.b16 %v33
  %v70 = vunpack.c.l.b16 %v34
  %v71 = vpack.c.b16 %v60, %v59
  %v72 = vpack.c.b16 %v62, %v61
  %v73 = vpack.c.b16 %v64, %v63
  %v74 = vpack.c.b16 %v66, %v65
  %v75 = vpack.c.b16 %v68, %v67
  %v76 = vpack.c.b16 %v70, %v69
  %vm83 = vcmask 785408
  %v85 = vsel %vm83, %v46, 0
  %87 = vmatprep.subr.bf16.mxu0 0
  %88 = vmatpush1.bf16.msra.mxu0 0
  %89 = vmatprep.subr.bf16.mxu0 0
  %90 = vmatpush1.bf16.msra.mxu0 0
  %91 = vmatprep.subr.bf16.mxu0 0
  %92 = vmatpush1.bf16.msra.mxu0 %v76
  %93 = vmatprep.subr.bf16.mxu0 0
  %94 = vmatpush1.bf16.msra.mxu0 %v75
  %95 = vmatprep.subr.bf16.mxu0 0
  %96 = vmatpush1.bf16.msra.mxu0 %v74
  %97 = vmatprep.subr.bf16.mxu0 0
  %98 = vmatpush1.bf16.msra.mxu0 %v73
  %99 = vmatprep.subr.bf16.mxu0 0
  %100 = vmatpush1.bf16.msra.mxu0 %v72
  %101 = vmatprep.subr.bf16.mxu0 0
  %102 = vmatpush1.bf16.msra.mxu0 %v71
  %103 = vmatprep.subr.bf16.mxu0 0
  %104 = vmatpush2.bf16.msra.mxu0 0
  %105 = vmatprep.subr.bf16.mxu0 0
  %106 = vmatpush2.bf16.msra.mxu0 0
  %107 = vmatprep.subr.bf16.mxu0 0
  %108 = vmatpush2.bf16.msra.mxu0 0
  %109 = vmatprep.subr.bf16.mxu0 0
  %110 = vmatpush2.bf16.msra.mxu0 0
  %111 = vmatprep.subr.bf16.mxu0 0
  %112 = vmatpush2.bf16.msra.mxu0 0
  %113 = vmatprep.subr.bf16.mxu0 0
  %114 = vmatpush2.bf16.msra.mxu0 0
  %115 = vmatprep.subr.bf16.mxu0 0
  %116 = vmatpush2.bf16.msra.mxu0 0
  %117 = vmatprep.subr.bf16.mxu0 0
  %118 = vmatpush2.bf16.msra.mxu0 0
  %119 = vmatprep.mubr.bf16.mxu0 0
  %120 = vmatmul.mubr.bf16.gmra.mxu0 %v85
  %v121 = vpop.f32.mrf.mxu0
  %v122 = vadd.f32 %v40, %v121
  %v123 = vpop.f32.mrf.mxu0
  %v124 = vpop.f32.mrf.mxu0
  %v125 = vadd.f32 %v40, %v124
  %v126 = vpop.f32.mrf.mxu0
  %127 = vdwg.mxu0
  %vm128 = vcmp.gt.f32.partialorder %v122, 0.0
  %vm129 = vcmp.gt.f32.partialorder %v125, 0.0
  %v130 = vmul.f32 %v122, 0.1
  %v131 = vmul.f32 %v125, 0.1
  %v132 = vsel %vm128, %v122, %v130
  %v133 = vsel %vm129, %v125, %v131
  %v134 = vld [vmem:[%s3] sm:$0xff]
  %v135 = vld [vmem:[%s3 + $0x8] sm:$0xff]
  %v136 = vld [vmem:[%s4] sm:$0x1]
  %v138 = vlaneseq
  %v139 = vshrl.u32 %v138, 7
  %v140 = vsub.s32 0, %v139
  %v141 = vrot.slane %v136, %v140
  %vm143 = vcmask 130048
  %v145 = vsel %vm143, %v132, 0
  %v148 = vsel %vm143, %v133, 0
  %150 = vmatprep.subr.mxu0 0.0
  %151 = vmatpush1.msra.mxu0 0.0
  %152 = vmatprep.subr.mxu0 0.0
  %153 = vmatpush1.msra.mxu0 0.0
  %154 = vmatprep.subr.mxu0 0.0
  %155 = vmatpush1.msra.mxu0 0.0
  %156 = vmatprep.subr.mxu0 0.0
  %157 = vmatpush1.msra.mxu0 0.0
  %158 = vmatprep.subr.mxu0 0.0
  %159 = vmatpush1.msra.mxu0 0.0
  %160 = vmatprep.subr.mxu0 0.0
  %161 = vmatpush1.msra.mxu0 0.0
  %162 = vmatprep.subr.mxu0 0.0
  %163 = vmatpush1.msra.mxu0 0.0
  %164 = vmatprep.subr.mxu0 0.0
  %165 = vmatpush1.msra.mxu0 0.0
  %166 = vmatprep.subr.mxu0 0.0
  %167 = vmatpush1.msra.mxu0 0.0
  %168 = vmatprep.subr.mxu0 0.0
  %169 = vmatpush1.msra.mxu0 0.0
  %170 = vmatprep.subr.mxu0 0.0
  %171 = vmatpush1.msra.mxu0 0.0
  %172 = vmatprep.subr.mxu0 0.0
  %173 = vmatpush1.msra.mxu0 0.0
  %174 = vmatprep.subr.mxu0 0.0
  %175 = vmatpush1.msra.mxu0 0.0
  %176 = vmatprep.subr.mxu0 0.0
  %177 = vmatpush1.msra.mxu0 0.0
  %178 = vmatprep.subr.mxu0 0.0
  %179 = vmatpush1.msra.mxu0 %v135
  %180 = vmatprep.subr.mxu0 0.0
  %181 = vmatpush1.msra.mxu0 %v134
  %182 = vmatprep.subr.mxu0 0.0
  %183 = vmatpush2.msra.mxu0 0.0
  %184 = vmatprep.subr.mxu0 0.0
  %185 = vmatpush2.msra.mxu0 0.0
  %186 = vmatprep.subr.mxu0 0.0
  %187 = vmatpush2.msra.mxu0 0.0
  %188 = vmatprep.subr.mxu0 0.0
  %189 = vmatpush2.msra.mxu0 0.0
  %190 = vmatprep.subr.mxu0 0.0
  %191 = vmatpush2.msra.mxu0 0.0
  %192 = vmatprep.subr.mxu0 0.0
  %193 = vmatpush2.msra.mxu0 0.0
  %194 = vmatprep.subr.mxu0 0.0
  %195 = vmatpush2.msra.mxu0 0.0
  %196 = vmatprep.subr.mxu0 0.0
  %197 = vmatpush2.msra.mxu0 0.0
  %198 = vmatprep.subr.mxu0 0.0
  %199 = vmatpush2.msra.mxu0 0.0
  %200 = vmatprep.subr.mxu0 0.0
  %201 = vmatpush2.msra.mxu0 0.0
  %202 = vmatprep.subr.mxu0 0.0
  %203 = vmatpush2.msra.mxu0 0.0
  %204 = vmatprep.subr.mxu0 0.0
  %205 = vmatpush2.msra.mxu0 0.0
  %206 = vmatprep.subr.mxu0 0.0
  %207 = vmatpush2.msra.mxu0 0.0
  %208 = vmatprep.subr.mxu0 0.0
  %209 = vmatpush2.msra.mxu0 0.0
  %210 = vmatprep.subr.mxu0 0.0
  %211 = vmatpush2.msra.mxu0 0.0
  %212 = vmatprep.subr.mxu0 0.0
  %213 = vmatpush2.msra.mxu0 0.0
  %214 = vmatprep.mubr.f32.mxu0 0.0
  %215 = vmatmul.mubr.f32.gmra.mxu0 %v145
  %v216 = vpop.f32.mrf.mxu0
  %v217 = vadd.f32 %v141, %v216
  %v218 = vpop.f32.mrf.mxu0
  %219 = vmatprep.mubr.f32.mxu0 0.0
  %220 = vmatmul.mubr.f32.gmra.mxu0 %v148
  %v221 = vpop.f32.mrf.mxu0
  %v222 = vadd.f32 %v141, %v221
  %v223 = vpop.f32.mrf.mxu0
  %224 = vdwg.mxu0
  %v225 = vmul.f32 %v217, 0.5
  %v226 = vmul.f32 %v222, 0.5
  %vm227 = vcmask 31744
  %v228 = vsel %vm227, %v225, -inf
  %229 = vmax.xlane.f32.xlu0 %v228
  %v230 = vpop.xlane.xlu0 %229
  %v231 = vsel %vm227, %v226, -inf
  %232 = vmax.xlane.f32.xlu0 %v231
  %v233 = vpop.xlane.xlu0 %232
  %v234 = vsub.f32 %v225, %v230
  %v235 = vsub.f32 %v226, %v233
  %v236 = vmul.f32 %v234, 1.442695
  %v237 = vpow.pop %v236
  %v238 = vmul.f32 %v235, 1.442695
  %v239 = vpow.pop %v238
  %v240 = vsel %vm227, %v237, 0.0
  %241 = vadd.xlane.f32.xlu0 %v240
  %v242 = vpop.xlane.xlu0 %241
  %v243 = vsel %vm227, %v239, 0.0
  %244 = vadd.xlane.f32.xlu0 %v243
  %v245 = vpop.xlane.xlu0 %244
  %v246 = vrcp.pop %v242
  %v247 = vrcp.pop %v245
  %v248 = vmul.f32 %v237, %v246
  %v249 = vmul.f32 %v239, %v247
  %250 = vst.msk [vmem:[%s5] sm:$0xff] %vm227, %v248
  %251 = vst.msk [vmem:[%s5 + $0x8] sm:$0xff] %vm227, %v249
  // Predicated region
  $region22: #{tpu_custom_call.1} parent=0 // pred_check
    _
  $region23: #{tpu_custom_call.1} parent=0 // pred_check_branch
    %253 = sbr.rel (0) target = $region25
  $region24: #{tpu_custom_call.1} parent=0 // pred_region
    _
  $region25: #{tpu_custom_call.1} parent=0 // pred_fallthru
    _
  // Predicated region
  $region26: #{tpu_custom_call.1} parent=0 // pred_check
    _
  $region27: #{tpu_custom_call.1} parent=0 // pred_check_branch
    %255 = sbr.rel (0) target = $region29
  $region28: #{tpu_custom_call.1} parent=0 // pred_region
    _
  $region29: #{tpu_custom_call.1} parent=0 // pred_fallthru
    _

</llo_original>
